<compile_context>
chip_gen: v7x
topology: tpu7x:2x2x1
jax: 0.10.0
libtpu: 0.0.40
codegen_flags: <defaults>
</compile_context>

<pallas_src>
import jax
import jax.numpy as jnp
from jax.experimental import pallas as pl
from jax.experimental.pallas import tpu as pltpu

_EPS = 1e-12          # F.normalize default eps
_LANE = 128           # TPU lane width
_MAX_S_TILE = 512     # sublane rows per grid step: 512*128 = 65536 elems/step
                      # VMEM (double-buffered): (6+9)*512*128*4B*2 ~= 7.5 MiB


def _rot6d_kernel(v_ref, r_ref):
    # v_ref: (6, s_tile, 128) planes, order [c0x c1x c0y c1y c0z c1z]
    #        (c0 = first column of the 3x2 rep, c1 = second column)
    # r_ref: (9, s_tile, 128) planes = row-major 3x3 with columns [b1 b2 b3]:
    #        [b1x b2x b3x b1y b2y b3y b1z b2z b3z]
    f32 = jnp.float32
    c0x = v_ref[0].astype(f32)
    c1x = v_ref[1].astype(f32)
    c0y = v_ref[2].astype(f32)
    c1y = v_ref[3].astype(f32)
    c0z = v_ref[4].astype(f32)
    c1z = v_ref[5].astype(f32)

    # b1 = c0 / max(||c0||, eps)  ==  c0 * rsqrt(max(||c0||^2, eps^2))
    inv0 = jax.lax.rsqrt(jnp.maximum(c0x * c0x + c0y * c0y + c0z * c0z,
                                     _EPS * _EPS))
    b1x, b1y, b1z = c0x * inv0, c0y * inv0, c0z * inv0

    dot = b1x * c1x + b1y * c1y + b1z * c1z
    ux, uy, uz = c1x - dot * b1x, c1y - dot * b1y, c1z - dot * b1z
    inv1 = jax.lax.rsqrt(jnp.maximum(ux * ux + uy * uy + uz * uz,
                                     _EPS * _EPS))
    b2x, b2y, b2z = ux * inv1, uy * inv1, uz * inv1

    b3x = b1y * b2z - b1z * b2y
    b3y = b1z * b2x - b1x * b2z
    b3z = b1x * b2y - b1y * b2x

    odt = r_ref.dtype
    r_ref[0] = b1x.astype(odt)
    r_ref[1] = b2x.astype(odt)
    r_ref[2] = b3x.astype(odt)
    r_ref[3] = b1y.astype(odt)
    r_ref[4] = b2y.astype(odt)
    r_ref[5] = b3y.astype(odt)
    r_ref[6] = b1z.astype(odt)
    r_ref[7] = b2z.astype(odt)
    r_ref[8] = b3z.astype(odt)


def _round_up(x, m):
    return ((x + m - 1) // m) * m


@jax.jit
def rot6d_decode(module_input):
    """ContinousRotReprDecoder.forward: any array with numel % 6 == 0 -> (N, 3, 3)."""
    x = module_input.reshape(-1, 6)                 # == .view(-1, 3, 2) flattened
    if not jnp.issubdtype(x.dtype, jnp.floating):
        x = x.astype(jnp.float32)
    dt = x.dtype
    n = x.shape[0]

    # Tiling: S = number of 128-lane rows; at least 2 grid steps when there is
    # more than one row of work (feeds both v7x TensorCores), tile capped so
    # the double-buffered VMEM footprint stays ~7.5 MiB on every generation.
    S = pl.cdiv(max(n, 1), _LANE)
    g = max(1, pl.cdiv(S, _MAX_S_TILE))
    if S > 8 and g == 1:
        g = 2
    s_tile = _round_up(pl.cdiv(S, g), 8)            # sublane-aligned block rows
    S_pad = s_tile * g
    m_pad = S_pad * _LANE

    # Component-major slab (6, S_pad, 128); padded lanes are zeros (finite
    # thanks to the eps clamp) and are sliced off below.
    v = jnp.pad(x.T, ((0, 0), (0, m_pad - n))).reshape(6, S_pad, _LANE)

    r = pl.pallas_call(
        _rot6d_kernel,
        out_shape=jax.ShapeDtypeStruct((9, S_pad, _LANE), dt),
        grid=(g,),
        in_specs=[pl.BlockSpec((6, s_tile, _LANE), lambda i: (0, i, 0))],
        out_specs=pl.BlockSpec((9, s_tile, _LANE), lambda i: (0, i, 0)),
        compiler_params=pltpu.CompilerParams(
            dimension_semantics=("parallel",)),
    )(v)

    return r.reshape(9, m_pad)[:, :n].T.reshape(n, 3, 3)


if __name__ == "__main__":
    key = jax.random.PRNGKey(0)
    k1, k2 = jax.random.split(key)

    def reference(x):
        v = x.astype(jnp.float32).reshape(-1, 3, 2)
        a1, a2 = v[:, :, 0], v[:, :, 1]
        b1 = a1 / jnp.maximum(jnp.linalg.norm(a1, axis=1, keepdims=True), _EPS)
        dot = jnp.sum(b1 * a2, axis=1, keepdims=True)
        u = a2 - dot * b1
        b2 = u / jnp.maximum(jnp.linalg.norm(u, axis=1, keepdims=True), _EPS)
        b3 = jnp.cross(b1, b2)
        return jnp.stack([b1, b2, b3], axis=-1)

    # typical HandPoser usage: (batch, num_joints*6) 6D reps from the decoder MLP
    batch, num_joints = 8, 15
    x_small = jax.random.normal(k1, (batch, num_joints * 6), jnp.float32)
    r_small = jax.block_until_ready(rot6d_decode(x_small))
    assert r_small.shape == (batch * num_joints, 3, 3)
    ref_small = reference(x_small)
    assert jnp.allclose(r_small, ref_small, atol=1e-5), float(
        jnp.max(jnp.abs(r_small - ref_small)))

    # larger case exercising a multi-step grid (grid = 2 here) + padding path
    x_big = jax.random.normal(k2, (3000, 6), jnp.float32)
    r_big = jax.block_until_ready(rot6d_decode(x_big))
    assert r_big.shape == (3000, 3, 3)
    assert jnp.allclose(r_big, reference(x_big), atol=1e-5)

    # rotation-matrix sanity: orthonormal with det ~ +1
    eye = jnp.eye(3)[None]
    assert jnp.allclose(r_big @ jnp.swapaxes(r_big, -1, -2), eye, atol=1e-4)
    assert jnp.allclose(jnp.linalg.det(r_big), 1.0, atol=1e-4)
    assert bool(jnp.all(jnp.isfinite(r_small))) and bool(jnp.all(jnp.isfinite(r_big)))

    # bf16 input path (halved DMA; compute stays f32 inside the kernel)
    x_bf16 = x_small.astype(jnp.bfloat16)
    r_bf16 = jax.block_until_ready(rot6d_decode(x_bf16))
    assert r_bf16.shape == (batch * num_joints, 3, 3)
    assert r_bf16.dtype == jnp.bfloat16
    assert bool(jnp.all(jnp.isfinite(r_bf16.astype(jnp.float32))))
    assert jnp.allclose(r_bf16.astype(jnp.float32), reference(x_bf16), atol=5e-2)

    print("KERNEL_OK")
</pallas_src>

<mosaic_0001>
module attributes {stable_mosaic.version = 11 : i64} {
  func.func @_rot6d_kernel(%arg0: i32, %arg1: memref<6x8x128xf32, #tpu.memory_space<vmem>>, %arg2: memref<9x8x128xf32, #tpu.memory_space<vmem>>) attributes {dimension_semantics = [#tpu.dimension_semantics<parallel>], iteration_bounds = array<i64: 1>, scalar_prefetch = 0 : i64, scratch_operands = 0 : i64, tpu.core_type = #tpu.core_type<tc>, window_params = [{transform_indices = @transform_0, window_bounds = array<i64: 6, 8, 128>}, {transform_indices = @transform_1, window_bounds = array<i64: 9, 8, 128>}]} {
    %c0 = arith.constant 0 : index
    %c0_0 = arith.constant 0 : index
    %c0_1 = arith.constant 0 : index
    %0 = vector.load %arg1[%c0, %c0_0, %c0_1] : memref<6x8x128xf32, #tpu.memory_space<vmem>>, vector<1x8x128xf32>
    %1 = vector.shape_cast %0 : vector<1x8x128xf32> to vector<8x128xf32>
    %c1 = arith.constant 1 : index
    %c0_2 = arith.constant 0 : index
    %c0_3 = arith.constant 0 : index
    %2 = vector.load %arg1[%c1, %c0_2, %c0_3] : memref<6x8x128xf32, #tpu.memory_space<vmem>>, vector<1x8x128xf32>
    %3 = vector.shape_cast %2 : vector<1x8x128xf32> to vector<8x128xf32>
    %c2 = arith.constant 2 : index
    %c0_4 = arith.constant 0 : index
    %c0_5 = arith.constant 0 : index
    %4 = vector.load %arg1[%c2, %c0_4, %c0_5] : memref<6x8x128xf32, #tpu.memory_space<vmem>>, vector<1x8x128xf32>
    %5 = vector.shape_cast %4 : vector<1x8x128xf32> to vector<8x128xf32>
    %c3 = arith.constant 3 : index
    %c0_6 = arith.constant 0 : index
    %c0_7 = arith.constant 0 : index
    %6 = vector.load %arg1[%c3, %c0_6, %c0_7] : memref<6x8x128xf32, #tpu.memory_space<vmem>>, vector<1x8x128xf32>
    %7 = vector.shape_cast %6 : vector<1x8x128xf32> to vector<8x128xf32>
    %c4 = arith.constant 4 : index
    %c0_8 = arith.constant 0 : index
    %c0_9 = arith.constant 0 : index
    %8 = vector.load %arg1[%c4, %c0_8, %c0_9] : memref<6x8x128xf32, #tpu.memory_space<vmem>>, vector<1x8x128xf32>
    %9 = vector.shape_cast %8 : vector<1x8x128xf32> to vector<8x128xf32>
    %c5 = arith.constant 5 : index
    %c0_10 = arith.constant 0 : index
    %c0_11 = arith.constant 0 : index
    %10 = vector.load %arg1[%c5, %c0_10, %c0_11] : memref<6x8x128xf32, #tpu.memory_space<vmem>>, vector<1x8x128xf32>
    %11 = vector.shape_cast %10 : vector<1x8x128xf32> to vector<8x128xf32>
    %12 = arith.mulf %1, %1 : vector<8x128xf32>
    %13 = arith.mulf %5, %5 : vector<8x128xf32>
    %14 = arith.addf %12, %13 : vector<8x128xf32>
    %15 = arith.mulf %9, %9 : vector<8x128xf32>
    %16 = arith.addf %14, %15 : vector<8x128xf32>
    %cst = arith.constant 1.000000e-24 : f32
    %17 = vector.broadcast %cst : f32 to vector<8x128xf32>
    %18 = arith.maximumf %16, %17 : vector<8x128xf32>
    %19 = math.rsqrt %18 : vector<8x128xf32>
    %20 = arith.mulf %1, %19 : vector<8x128xf32>
    %21 = arith.mulf %5, %19 : vector<8x128xf32>
    %22 = arith.mulf %9, %19 : vector<8x128xf32>
    %23 = arith.mulf %20, %3 : vector<8x128xf32>
    %24 = arith.mulf %21, %7 : vector<8x128xf32>
    %25 = arith.addf %23, %24 : vector<8x128xf32>
    %26 = arith.mulf %22, %11 : vector<8x128xf32>
    %27 = arith.addf %25, %26 : vector<8x128xf32>
    %28 = arith.mulf %27, %20 : vector<8x128xf32>
    %29 = arith.subf %3, %28 : vector<8x128xf32>
    %30 = arith.mulf %27, %21 : vector<8x128xf32>
    %31 = arith.subf %7, %30 : vector<8x128xf32>
    %32 = arith.mulf %27, %22 : vector<8x128xf32>
    %33 = arith.subf %11, %32 : vector<8x128xf32>
    %34 = arith.mulf %29, %29 : vector<8x128xf32>
    %35 = arith.mulf %31, %31 : vector<8x128xf32>
    %36 = arith.addf %34, %35 : vector<8x128xf32>
    %37 = arith.mulf %33, %33 : vector<8x128xf32>
    %38 = arith.addf %36, %37 : vector<8x128xf32>
    %cst_12 = arith.constant 1.000000e-24 : f32
    %39 = vector.broadcast %cst_12 : f32 to vector<8x128xf32>
    %40 = arith.maximumf %38, %39 : vector<8x128xf32>
    %41 = math.rsqrt %40 : vector<8x128xf32>
    %42 = arith.mulf %29, %41 : vector<8x128xf32>
    %43 = arith.mulf %31, %41 : vector<8x128xf32>
    %44 = arith.mulf %33, %41 : vector<8x128xf32>
    %45 = arith.mulf %21, %44 : vector<8x128xf32>
    %46 = arith.mulf %22, %43 : vector<8x128xf32>
    %47 = arith.subf %45, %46 : vector<8x128xf32>
    %48 = arith.mulf %22, %42 : vector<8x128xf32>
    %49 = arith.mulf %20, %44 : vector<8x128xf32>
    %50 = arith.subf %48, %49 : vector<8x128xf32>
    %51 = arith.mulf %20, %43 : vector<8x128xf32>
    %52 = arith.mulf %21, %42 : vector<8x128xf32>
    %53 = arith.subf %51, %52 : vector<8x128xf32>
    %c0_13 = arith.constant 0 : index
    %c0_14 = arith.constant 0 : index
    %c0_15 = arith.constant 0 : index
    %54 = vector.load %arg2[%c0_13, %c0_14, %c0_15] : memref<9x8x128xf32, #tpu.memory_space<vmem>>, vector<1x8x128xf32>
    %55 = vector.shape_cast %54 : vector<1x8x128xf32> to vector<8x128xf32>
    %56 = vector.shape_cast %20 : vector<8x128xf32> to vector<1x8x128xf32>
    tpu.vector_store %arg2[%c0_13, %c0_14, %c0_15], %56 {strides = array<i32>} : memref<9x8x128xf32, #tpu.memory_space<vmem>>, vector<1x8x128xf32>,
    %c1_16 = arith.constant 1 : index
    %c0_17 = arith.constant 0 : index
    %c0_18 = arith.constant 0 : index
    %57 = vector.load %arg2[%c1_16, %c0_17, %c0_18] : memref<9x8x128xf32, #tpu.memory_space<vmem>>, vector<1x8x128xf32>
    %58 = vector.shape_cast %57 : vector<1x8x128xf32> to vector<8x128xf32>
    %59 = vector.shape_cast %42 : vector<8x128xf32> to vector<1x8x128xf32>
    tpu.vector_store %arg2[%c1_16, %c0_17, %c0_18], %59 {strides = array<i32>} : memref<9x8x128xf32, #tpu.memory_space<vmem>>, vector<1x8x128xf32>,
    %c2_19 = arith.constant 2 : index
    %c0_20 = arith.constant 0 : index
    %c0_21 = arith.constant 0 : index
    %60 = vector.load %arg2[%c2_19, %c0_20, %c0_21] : memref<9x8x128xf32, #tpu.memory_space<vmem>>, vector<1x8x128xf32>
    %61 = vector.shape_cast %60 : vector<1x8x128xf32> to vector<8x128xf32>
    %62 = vector.shape_cast %47 : vector<8x128xf32> to vector<1x8x128xf32>
    tpu.vector_store %arg2[%c2_19, %c0_20, %c0_21], %62 {strides = array<i32>} : memref<9x8x128xf32, #tpu.memory_space<vmem>>, vector<1x8x128xf32>,
    %c3_22 = arith.constant 3 : index
    %c0_23 = arith.constant 0 : index
    %c0_24 = arith.constant 0 : index
    %63 = vector.load %arg2[%c3_22, %c0_23, %c0_24] : memref<9x8x128xf32, #tpu.memory_space<vmem>>, vector<1x8x128xf32>
    %64 = vector.shape_cast %63 : vector<1x8x128xf32> to vector<8x128xf32>
    %65 = vector.shape_cast %21 : vector<8x128xf32> to vector<1x8x128xf32>
    tpu.vector_store %arg2[%c3_22, %c0_23, %c0_24], %65 {strides = array<i32>} : memref<9x8x128xf32, #tpu.memory_space<vmem>>, vector<1x8x128xf32>,
    %c4_25 = arith.constant 4 : index
    %c0_26 = arith.constant 0 : index
    %c0_27 = arith.constant 0 : index
    %66 = vector.load %arg2[%c4_25, %c0_26, %c0_27] : memref<9x8x128xf32, #tpu.memory_space<vmem>>, vector<1x8x128xf32>
    %67 = vector.shape_cast %66 : vector<1x8x128xf32> to vector<8x128xf32>
    %68 = vector.shape_cast %43 : vector<8x128xf32> to vector<1x8x128xf32>
    tpu.vector_store %arg2[%c4_25, %c0_26, %c0_27], %68 {strides = array<i32>} : memref<9x8x128xf32, #tpu.memory_space<vmem>>, vector<1x8x128xf32>,
    %c5_28 = arith.constant 5 : index
    %c0_29 = arith.constant 0 : index
    %c0_30 = arith.constant 0 : index
    %69 = vector.load %arg2[%c5_28, %c0_29, %c0_30] : memref<9x8x128xf32, #tpu.memory_space<vmem>>, vector<1x8x128xf32>
    %70 = vector.shape_cast %69 : vector<1x8x128xf32> to vector<8x128xf32>
    %71 = vector.shape_cast %50 : vector<8x128xf32> to vector<1x8x128xf32>
    tpu.vector_store %arg2[%c5_28, %c0_29, %c0_30], %71 {strides = array<i32>} : memref<9x8x128xf32, #tpu.memory_space<vmem>>, vector<1x8x128xf32>,
    %c6 = arith.constant 6 : index
    %c0_31 = arith.constant 0 : index
    %c0_32 = arith.constant 0 : index
    %72 = vector.load %arg2[%c6, %c0_31, %c0_32] : memref<9x8x128xf32, #tpu.memory_space<vmem>>, vector<1x8x128xf32>
    %73 = vector.shape_cast %72 : vector<1x8x128xf32> to vector<8x128xf32>
    %74 = vector.shape_cast %22 : vector<8x128xf32> to vector<1x8x128xf32>
    tpu.vector_store %arg2[%c6, %c0_31, %c0_32], %74 {strides = array<i32>} : memref<9x8x128xf32, #tpu.memory_space<vmem>>, vector<1x8x128xf32>,
    %c7 = arith.constant 7 : index
    %c0_33 = arith.constant 0 : index
    %c0_34 = arith.constant 0 : index
    %75 = vector.load %arg2[%c7, %c0_33, %c0_34] : memref<9x8x128xf32, #tpu.memory_space<vmem>>, vector<1x8x128xf32>
    %76 = vector.shape_cast %75 : vector<1x8x128xf32> to vector<8x128xf32>
    %77 = vector.shape_cast %44 : vector<8x128xf32> to vector<1x8x128xf32>
    tpu.vector_store %arg2[%c7, %c0_33, %c0_34], %77 {strides = array<i32>} : memref<9x8x128xf32, #tpu.memory_space<vmem>>, vector<1x8x128xf32>,
    %c8 = arith.constant 8 : index
    %c0_35 = arith.constant 0 : index
    %c0_36 = arith.constant 0 : index
    %78 = vector.load %arg2[%c8, %c0_35, %c0_36] : memref<9x8x128xf32, #tpu.memory_space<vmem>>, vector<1x8x128xf32>
    %79 = vector.shape_cast %78 : vector<1x8x128xf32> to vector<8x128xf32>
    %80 = vector.shape_cast %53 : vector<8x128xf32> to vector<1x8x128xf32>
    tpu.vector_store %arg2[%c8, %c0_35, %c0_36], %80 {strides = array<i32>} : memref<9x8x128xf32, #tpu.memory_space<vmem>>, vector<1x8x128xf32>,
    return
  }
  func.func @transform_0(%arg0: i32) -> (i32, i32, i32) {
    %c0_i32 = arith.constant 0 : i32
    %c0_i32_0 = arith.constant 0 : i32
    %c0_i32_1 = arith.constant 0 : i32
    return %c0_i32, %arg0, %c0_i32_0 : i32, i32, i32
  }
  func.func @transform_1(%arg0: i32) -> (i32, i32, i32) {
    %c0_i32 = arith.constant 0 : i32
    %c0_i32_0 = arith.constant 0 : i32
    %c0_i32_1 = arith.constant 0 : i32
    return %c0_i32, %arg0, %c0_i32_0 : i32, i32, i32
  }
}

</mosaic_0001>

<llo_original>
// kernel: rot6d_decode.1
$region0: #{rot6d_decode.1}
  #allocation0 [shape = 'u32[]', space=smem, size = 0x4, offset = 0x4, fixed_abs, tag = 'smem constant byte address 0x4 - core index']
  #allocation1 [shape = 'u32[144,128]{1,0:T(1,128)}', space=vmem, size = 0x12000, scoped, tag = 'internal scratch']
  %s0 = inlined_call_operand.vmem [shape: f32[6,8,128], index: 0, kind: input, shape index: {}]
  %s1 = inlined_call_operand.vmem [shape: f32[9,8,128], index: 1, kind: output, shape index: {}]
  %s2 = sld [smem:[#allocation0]]
  $region14: #{rot6d_decode.1} parent=0
    _
  %s4 = ssub.s32 1, %s2
  %s5 = scalar_select 0, %s4, %s2
  // Predicated region
  $region2: #{rot6d_decode.1} parent=0 // pred_check
    _
  $region3: #{rot6d_decode.1} parent=0 // pred_check_branch
    %7 = sbr.rel (0) target = $region5
  $region4: #{rot6d_decode.1} parent=0 // pred_region
    _
  $region5: #{rot6d_decode.1} parent=0 // pred_fallthru
    _
  %v8 = vld [vmem:[%s0] sm:$0xff]
  %s9 = scalar_lea.vmem %s0, 8
  %v10 = vld [vmem:[%s9] sm:$0xff]
  %s11 = scalar_lea.vmem %s0, 16
  %v12 = vld [vmem:[%s11] sm:$0xff]
  %s13 = scalar_lea.vmem %s0, 24
  %v14 = vld [vmem:[%s13] sm:$0xff]
  %s15 = scalar_lea.vmem %s0, 32
  %v16 = vld [vmem:[%s15] sm:$0xff]
  %s17 = scalar_lea.vmem %s0, 40
  %v18 = vld [vmem:[%s17] sm:$0xff]
  %v19 = vmul.f32 %v8, %v8
  %v20 = vmul.f32 %v12, %v12
  %v21 = vadd.f32 %v19, %v20
  %v22 = vmul.f32 %v16, %v16
  %v23 = vadd.f32 %v21, %v22
  %v24 = vmax.f32 %v23, 1e-24
  %v25 = vrsqrt.pop %v24
  %v26 = vmul.f32 %v8, %v25
  %v27 = vmul.f32 %v12, %v25
  %v28 = vmul.f32 %v16, %v25
  %v29 = vmul.f32 %v26, %v10
  %v30 = vmul.f32 %v27, %v14
  %v31 = vadd.f32 %v29, %v30
  %v32 = vmul.f32 %v28, %v18
  %v33 = vadd.f32 %v31, %v32
  %v34 = vmul.f32 %v33, %v26
  %v35 = vsub.f32 %v10, %v34
  %v36 = vmul.f32 %v33, %v27
  %v37 = vsub.f32 %v14, %v36
  %v38 = vmul.f32 %v33, %v28
  %v39 = vsub.f32 %v18, %v38
  %v40 = vmul.f32 %v35, %v35
  %v41 = vmul.f32 %v37, %v37
  %v42 = vadd.f32 %v40, %v41
  %v43 = vmul.f32 %v39, %v39
  %v44 = vadd.f32 %v42, %v43
  %v45 = vmax.f32 %v44, 1e-24
  %v46 = vrsqrt.pop %v45
  %v47 = vmul.f32 %v35, %v46
  %v48 = vmul.f32 %v37, %v46
  %v49 = vmul.f32 %v39, %v46
  %v50 = vmul.f32 %v27, %v49
  %v51 = vmul.f32 %v28, %v48
  %v52 = vsub.f32 %v50, %v51
  %v53 = vmul.f32 %v28, %v47
  %v54 = vmul.f32 %v26, %v49
  %v55 = vsub.f32 %v53, %v54
  %v56 = vmul.f32 %v26, %v48
  %v57 = vmul.f32 %v27, %v47
  %v58 = vsub.f32 %v56, %v57
  %59 = vst [vmem:[%s1] sm:$0xff] %v26
  %s60 = scalar_lea.vmem %s1, 8
  %61 = vst [vmem:[%s60] sm:$0xff] %v47
  %s62 = scalar_lea.vmem %s1, 16
  %63 = vst [vmem:[%s62] sm:$0xff] %v52
  %s64 = scalar_lea.vmem %s1, 24
  %65 = vst [vmem:[%s64] sm:$0xff] %v27
  %s66 = scalar_lea.vmem %s1, 32
  %67 = vst [vmem:[%s66] sm:$0xff] %v48
  %s68 = scalar_lea.vmem %s1, 40
  %69 = vst [vmem:[%s68] sm:$0xff] %v55
  %s70 = scalar_lea.vmem %s1, 48
  %71 = vst [vmem:[%s70] sm:$0xff] %v28
  %s72 = scalar_lea.vmem %s1, 56
  %73 = vst [vmem:[%s72] sm:$0xff] %v49
  %s74 = scalar_lea.vmem %s1, 64
  %75 = vst [vmem:[%s74] sm:$0xff] %v58
  // Predicated region
  $region6: #{rot6d_decode.1} parent=0 // pred_check
    _
  $region7: #{rot6d_decode.1} parent=0 // pred_check_branch
    %77 = sbr.rel (0) target = $region9
  $region8: #{rot6d_decode.1} parent=0 // pred_region
    _
  $region9: #{rot6d_decode.1} parent=0 // pred_fallthru
    _
  // Predicated region
  $region10: #{rot6d_decode.1} parent=0 // pred_check
    _
  $region11: #{rot6d_decode.1} parent=0 // pred_check_branch
    %79 = sbr.rel (0) target = $region13
  $region12: #{rot6d_decode.1} parent=0 // pred_region
    _
  $region13: #{rot6d_decode.1} parent=0 // pred_fallthru
    _

</llo_original>
